<compile_context>
chip_gen: v5e
topology: v5e:2x2
jax: 0.10.0
libtpu: 0.0.40
codegen_flags: <defaults>
</compile_context>

<pallas_src>
import jax
import jax.numpy as jnp
from jax.experimental import pallas as pl
from jax.experimental.pallas import tpu as pltpu


def _round_up(x, m):
    return ((x + m - 1) // m) * m


def _ffnn_kernel(x_ref,
                 w1_ref, b1_ref,
                 w2_ref, b2_ref,
                 w3_ref, b3_ref,
                 w4_ref, b4_ref,
                 o_ref):
    dt = w1_ref.dtype  # compute dtype of the operands (f32 or bf16)

    # Layer 1: Linear + ReLU  (Dropout = identity in eval)
    h = jnp.dot(x_ref[...], w1_ref[...], preferred_element_type=jnp.float32)
    h = jnp.maximum(h + b1_ref[...].astype(jnp.float32), 0.0)
    # Layer 2: Linear + ReLU
    h = jnp.dot(h.astype(dt), w2_ref[...], preferred_element_type=jnp.float32)
    h = jnp.maximum(h + b2_ref[...].astype(jnp.float32), 0.0)
    # Layer 3: Linear + ReLU (lane-padded to 128 wide; pad cols are exactly 0)
    h = jnp.dot(h.astype(dt), w3_ref[...], preferred_element_type=jnp.float32)
    h = jnp.maximum(h + b3_ref[...].astype(jnp.float32), 0.0)
    # Output layer: Linear (no activation), lane-padded output
    out = jnp.dot(h.astype(dt), w4_ref[...], preferred_element_type=jnp.float32)
    o_ref[...] = (out + b4_ref[...].astype(jnp.float32)).astype(o_ref.dtype)


def deep_ffnn_forward(x, params, *, tm=None, compute_dtype=jnp.float32):
    """x: (B, seq_len, embedding_dim). Returns logits (B, output_dim) float32.

    compute_dtype=jnp.bfloat16 is recommended on v6e/v7x (f32 accumulation is
    kept inside the kernel either way).
    """
    B = x.shape[0]
    x_flat = x.reshape(B, -1).astype(compute_dtype)  # == torch x.view(B, -1)
    in_dim = x_flat.shape[1]

    (w1, b1), (w2, b2), (w3, b3), (w4, b4) = params
    out_dim = w4.shape[1]

    # --- lane-pad the narrow dims (hidden[-1]=64, out=5) up to 128 ----------
    h3 = w3.shape[1]
    h3_pad = _round_up(h3, 128)
    out_pad = _round_up(out_dim, 128)

    w3p = jnp.pad(w3, ((0, 0), (0, h3_pad - h3)))
    b3p = jnp.pad(b3, ((0, 0), (0, h3_pad - h3)))
    w4p = jnp.pad(w4, ((0, h3_pad - h3), (0, out_pad - out_dim)))
    b4p = jnp.pad(b4, ((0, 0), (0, out_pad - out_dim)))

    weights = tuple(a.astype(compute_dtype)
                    for a in (w1, b1, w2, b2, w3p, b3p, w4p, b4p))

    # --- batch tiling --------------------------------------------------------
    # TM=256 fills the v6e/v7x MXU M dimension (use tm=128 on v5e).  Small
    # batches are only padded up to a full 8-row sublane group.
    if tm is None:
        tm = 256 if B >= 256 else _round_up(B, 8)
    b_pad = _round_up(B, tm)
    if b_pad != B:
        x_flat = jnp.pad(x_flat, ((0, b_pad - B), (0, 0)))

    grid = (b_pad // tm,)

    def resident(a):
        # weights/biases: same block every grid step -> fetched once, stay in VMEM
        return pl.BlockSpec(a.shape, lambda i: (0,) * a.ndim)

    out_padded = pl.pallas_call(
        _ffnn_kernel,
        out_shape=jax.ShapeDtypeStruct((b_pad, out_pad), jnp.float32),
        grid=grid,
        in_specs=[pl.BlockSpec((tm, in_dim), lambda i: (i, 0))]
                 + [resident(a) for a in weights],
        out_specs=pl.BlockSpec((tm, out_pad), lambda i: (i, 0)),
        compiler_params=pltpu.CompilerParams(
            dimension_semantics=("parallel",)),
    )(x_flat, *weights)

    return out_padded[:B, :out_dim]


def init_linear(key, fan_in, fan_out):
    """Deterministic init mimicking torch.nn.Linear default U(-1/sqrt(fan_in), +)."""
    kw, kb = jax.random.split(key)
    bound = 1.0 / (fan_in ** 0.5)
    w = jax.random.uniform(kw, (fan_in, fan_out), jnp.float32, -bound, bound)
    # biases kept 2D (1, out) so broadcasting inside the kernel stays lane-aligned
    b = jax.random.uniform(kb, (1, fan_out), jnp.float32, -bound, bound)
    return w, b


def reference_forward(x, params):
    h = x.reshape(x.shape[0], -1)
    (w1, b1), (w2, b2), (w3, b3), (w4, b4) = params
    h = jnp.maximum(h @ w1 + b1, 0.0)
    h = jnp.maximum(h @ w2 + b2, 0.0)
    h = jnp.maximum(h @ w3 + b3, 0.0)
    return h @ w4 + b4


if __name__ == "__main__":
    # Small shapes consistent with the module:
    #   embedding_dim=32, max_length=8  -> input_dim = 8*32 = 256
    #   hidden_dims=[256, 128, 64], output_dim=5 (number of rating classes)
    batch = 2
    seq_len = 8
    embedding_dim = 32
    input_dim = seq_len * embedding_dim
    hidden_dims = [256, 128, 64]
    output_dim = 5

    key = jax.random.PRNGKey(0)
    kx, k1, k2, k3, k4 = jax.random.split(key, 5)

    x = jax.random.normal(kx, (batch, seq_len, embedding_dim), jnp.float32)

    params = (
        init_linear(k1, input_dim, hidden_dims[0]),
        init_linear(k2, hidden_dims[0], hidden_dims[1]),
        init_linear(k3, hidden_dims[1], hidden_dims[2]),
        init_linear(k4, hidden_dims[2], output_dim),
    )

    logits = deep_ffnn_forward(x, params)
    logits = jax.block_until_ready(logits)

    ref = reference_forward(x, params)
    assert logits.shape == (batch, output_dim)
    assert jnp.allclose(logits, ref, atol=1e-4, rtol=1e-4), "mismatch vs reference"

    print("KERNEL_OK")
</pallas_src>

<mosaic_0001>
module attributes {stable_mosaic.version = 11 : i64} {
  func.func @_ffnn_kernel(%arg0: i32, %arg1: memref<8x256xf32, #tpu.memory_space<vmem>>, %arg2: memref<256x256xf32, #tpu.memory_space<vmem>>, %arg3: memref<1x256xf32, #tpu.memory_space<vmem>>, %arg4: memref<256x128xf32, #tpu.memory_space<vmem>>, %arg5: memref<1x128xf32, #tpu.memory_space<vmem>>, %arg6: memref<128x128xf32, #tpu.memory_space<vmem>>, %arg7: memref<1x128xf32, #tpu.memory_space<vmem>>, %arg8: memref<128x128xf32, #tpu.memory_space<vmem>>, %arg9: memref<1x128xf32, #tpu.memory_space<vmem>>, %arg10: memref<8x128xf32, #tpu.memory_space<vmem>>) attributes {dimension_semantics = [#tpu.dimension_semantics<parallel>], iteration_bounds = array<i64: 1>, scalar_prefetch = 0 : i64, scratch_operands = 0 : i64, tpu.core_type = #tpu.core_type<tc>, window_params = [{transform_indices = @transform_0, window_bounds = array<i64: 8, 256>}, {pipeline_mode = #tpu.pipeline_mode<synchronous>, transform_indices = @transform_1, window_bounds = array<i64: 256, 256>}, {pipeline_mode = #tpu.pipeline_mode<synchronous>, transform_indices = @transform_2, window_bounds = array<i64: 1, 256>}, {pipeline_mode = #tpu.pipeline_mode<synchronous>, transform_indices = @transform_3, window_bounds = array<i64: 256, 128>}, {pipeline_mode = #tpu.pipeline_mode<synchronous>, transform_indices = @transform_4, window_bounds = array<i64: 1, 128>}, {pipeline_mode = #tpu.pipeline_mode<synchronous>, transform_indices = @transform_5, window_bounds = array<i64: 128, 128>}, {pipeline_mode = #tpu.pipeline_mode<synchronous>, transform_indices = @transform_6, window_bounds = array<i64: 1, 128>}, {pipeline_mode = #tpu.pipeline_mode<synchronous>, transform_indices = @transform_7, window_bounds = array<i64: 128, 128>}, {pipeline_mode = #tpu.pipeline_mode<synchronous>, transform_indices = @transform_8, window_bounds = array<i64: 1, 128>}, {transform_indices = @transform_9, window_bounds = array<i64: 8, 128>}]} {
    %c0 = arith.constant 0 : index
    %c0_0 = arith.constant 0 : index
    %0 = vector.load %arg1[%c0, %c0_0] : memref<8x256xf32, #tpu.memory_space<vmem>>, vector<8x256xf32>
    %c0_1 = arith.constant 0 : index
    %c0_2 = arith.constant 0 : index
    %1 = vector.load %arg2[%c0_1, %c0_2] : memref<256x256xf32, #tpu.memory_space<vmem>>, vector<256x256xf32>
    %cst = arith.constant dense<0.000000e+00> : vector<8x256xf32>
    %2 = tpu.matmul %0, %1, %cst {dimension_numbers = #tpu.dot_dimension_numbers<[1], [0], [0], [1], [0, 0, 1, 1], [], []>} : vector<8x256xf32>, vector<256x256xf32>, vector<8x256xf32> -> vector<8x256xf32>
    %c0_3 = arith.constant 0 : index
    %c0_4 = arith.constant 0 : index
    %3 = vector.load %arg3[%c0_3, %c0_4] : memref<1x256xf32, #tpu.memory_space<vmem>>, vector<1x256xf32>
    %4 = vector.broadcast %3 : vector<1x256xf32> to vector<8x256xf32>
    %5 = arith.addf %2, %4 : vector<8x256xf32>
    %cst_5 = arith.constant 0.000000e+00 : f32
    %6 = vector.broadcast %cst_5 : f32 to vector<8x256xf32>
    %7 = arith.maximumf %5, %6 : vector<8x256xf32>
    %c0_6 = arith.constant 0 : index
    %c0_7 = arith.constant 0 : index
    %8 = vector.load %arg4[%c0_6, %c0_7] : memref<256x128xf32, #tpu.memory_space<vmem>>, vector<256x128xf32>
    %cst_8 = arith.constant dense<0.000000e+00> : vector<8x128xf32>
    %9 = tpu.matmul %7, %8, %cst_8 {dimension_numbers = #tpu.dot_dimension_numbers<[1], [0], [0], [1], [0, 0, 1, 1], [], []>} : vector<8x256xf32>, vector<256x128xf32>, vector<8x128xf32> -> vector<8x128xf32>
    %c0_9 = arith.constant 0 : index
    %c0_10 = arith.constant 0 : index
    %10 = vector.load %arg5[%c0_9, %c0_10] : memref<1x128xf32, #tpu.memory_space<vmem>>, vector<1x128xf32>
    %11 = vector.broadcast %10 : vector<1x128xf32> to vector<8x128xf32>
    %12 = arith.addf %9, %11 : vector<8x128xf32>
    %cst_11 = arith.constant 0.000000e+00 : f32
    %13 = vector.broadcast %cst_11 : f32 to vector<8x128xf32>
    %14 = arith.maximumf %12, %13 : vector<8x128xf32>
    %c0_12 = arith.constant 0 : index
    %c0_13 = arith.constant 0 : index
    %15 = vector.load %arg6[%c0_12, %c0_13] : memref<128x128xf32, #tpu.memory_space<vmem>>, vector<128x128xf32>
    %cst_14 = arith.constant dense<0.000000e+00> : vector<8x128xf32>
    %16 = tpu.matmul %14, %15, %cst_14 {dimension_numbers = #tpu.dot_dimension_numbers<[1], [0], [0], [1], [0, 0, 1, 1], [], []>} : vector<8x128xf32>, vector<128x128xf32>, vector<8x128xf32> -> vector<8x128xf32>
    %c0_15 = arith.constant 0 : index
    %c0_16 = arith.constant 0 : index
    %17 = vector.load %arg7[%c0_15, %c0_16] : memref<1x128xf32, #tpu.memory_space<vmem>>, vector<1x128xf32>
    %18 = vector.broadcast %17 : vector<1x128xf32> to vector<8x128xf32>
    %19 = arith.addf %16, %18 : vector<8x128xf32>
    %cst_17 = arith.constant 0.000000e+00 : f32
    %20 = vector.broadcast %cst_17 : f32 to vector<8x128xf32>
    %21 = arith.maximumf %19, %20 : vector<8x128xf32>
    %c0_18 = arith.constant 0 : index
    %c0_19 = arith.constant 0 : index
    %22 = vector.load %arg8[%c0_18, %c0_19] : memref<128x128xf32, #tpu.memory_space<vmem>>, vector<128x128xf32>
    %cst_20 = arith.constant dense<0.000000e+00> : vector<8x128xf32>
    %23 = tpu.matmul %21, %22, %cst_20 {dimension_numbers = #tpu.dot_dimension_numbers<[1], [0], [0], [1], [0, 0, 1, 1], [], []>} : vector<8x128xf32>, vector<128x128xf32>, vector<8x128xf32> -> vector<8x128xf32>
    %c0_21 = arith.constant 0 : index
    %c0_22 = arith.constant 0 : index
    %24 = vector.load %arg9[%c0_21, %c0_22] : memref<1x128xf32, #tpu.memory_space<vmem>>, vector<1x128xf32>
    %25 = vector.broadcast %24 : vector<1x128xf32> to vector<8x128xf32>
    %26 = arith.addf %23, %25 : vector<8x128xf32>
    %c0_23 = arith.constant 0 : index
    %c0_24 = arith.constant 0 : index
    %27 = vector.load %arg10[%c0_23, %c0_24] : memref<8x128xf32, #tpu.memory_space<vmem>>, vector<8x128xf32>
    tpu.vector_store %arg10[%c0_23, %c0_24], %26 {strides = array<i32>} : memref<8x128xf32, #tpu.memory_space<vmem>>, vector<8x128xf32>,
    return
  }
  func.func @transform_0(%arg0: i32) -> (i32, i32) {
    %c0_i32 = arith.constant 0 : i32
    %c0_i32_0 = arith.constant 0 : i32
    return %arg0, %c0_i32 : i32, i32
  }
  func.func @transform_1(%arg0: i32) -> (i32, i32) {
    %c0_i32 = arith.constant 0 : i32
    %c0_i32_0 = arith.constant 0 : i32
    %c0_i32_1 = arith.constant 0 : i32
    return %c0_i32, %c0_i32_0 : i32, i32
  }
  func.func @transform_2(%arg0: i32) -> (i32, i32) {
    %c0_i32 = arith.constant 0 : i32
    %c0_i32_0 = arith.constant 0 : i32
    %c0_i32_1 = arith.constant 0 : i32
    return %c0_i32, %c0_i32_0 : i32, i32
  }
  func.func @transform_3(%arg0: i32) -> (i32, i32) {
    %c0_i32 = arith.constant 0 : i32
    %c0_i32_0 = arith.constant 0 : i32
    %c0_i32_1 = arith.constant 0 : i32
    return %c0_i32, %c0_i32_0 : i32, i32
  }
  func.func @transform_4(%arg0: i32) -> (i32, i32) {
    %c0_i32 = arith.constant 0 : i32
    %c0_i32_0 = arith.constant 0 : i32
    %c0_i32_1 = arith.constant 0 : i32
    return %c0_i32, %c0_i32_0 : i32, i32
  }
  func.func @transform_5(%arg0: i32) -> (i32, i32) {
    %c0_i32 = arith.constant 0 : i32
    %c0_i32_0 = arith.constant 0 : i32
    %c0_i32_1 = arith.constant 0 : i32
    return %c0_i32, %c0_i32_0 : i32, i32
  }
  func.func @transform_6(%arg0: i32) -> (i32, i32) {
    %c0_i32 = arith.constant 0 : i32
    %c0_i32_0 = arith.constant 0 : i32
    %c0_i32_1 = arith.constant 0 : i32
    return %c0_i32, %c0_i32_0 : i32, i32
  }
  func.func @transform_7(%arg0: i32) -> (i32, i32) {
    %c0_i32 = arith.constant 0 : i32
    %c0_i32_0 = arith.constant 0 : i32
    %c0_i32_1 = arith.constant 0 : i32
    return %c0_i32, %c0_i32_0 : i32, i32
  }
  func.func @transform_8(%arg0: i32) -> (i32, i32) {
    %c0_i32 = arith.constant 0 : i32
    %c0_i32_0 = arith.constant 0 : i32
    %c0_i32_1 = arith.constant 0 : i32
    return %c0_i32, %c0_i32_0 : i32, i32
  }
  func.func @transform_9(%arg0: i32) -> (i32, i32) {
    %c0_i32 = arith.constant 0 : i32
    %c0_i32_0 = arith.constant 0 : i32
    return %arg0, %c0_i32 : i32, i32
  }
}

</mosaic_0001>

<llo_original>
// kernel: tpu_custom_call.1
$region0: #{tpu_custom_call.1}
  #allocation0 [shape = 'u32[]', space=smem, size = 0x4, offset = 0x4, fixed_abs, tag = 'smem constant byte address 0x4 - core index']
  #allocation1 [shape = 'u32[72,128]{1,0:T(1,128)}', space=vmem, size = 0x9000, scoped, tag = 'internal scratch']
  %s0 = inlined_call_operand.hbm [shape: f32[8,256], index: 0, kind: input, shape index: {}]
  %s1 = inlined_call_operand.hbm [shape: f32[256,256], index: 1, kind: input, shape index: {}]
  %s2 = inlined_call_operand.hbm [shape: f32[1,256], index: 2, kind: input, shape index: {}]
  %s3 = inlined_call_operand.hbm [shape: f32[256,128], index: 3, kind: input, shape index: {}]
  %s4 = inlined_call_operand.vmem [shape: f32[1,128], index: 4, kind: input, shape index: {}]
  %s5 = inlined_call_operand.hbm [shape: f32[128,128], index: 5, kind: input, shape index: {}]
  %s6 = inlined_call_operand.vmem [shape: f32[1,128], index: 6, kind: input, shape index: {}]
  %s7 = inlined_call_operand.hbm [shape: f32[128,128], index: 7, kind: input, shape index: {}]
  %s8 = inlined_call_operand.vmem [shape: f32[1,128], index: 8, kind: input, shape index: {}]
  %s9 = inlined_call_operand.hbm [shape: f32[8,128], index: 9, kind: output, shape index: {}]
  %s10 = sld [smem:[#allocation0]]
  $region70: #{tpu_custom_call.1} parent=0
    _
  %s12 = ssub.s32 1, %s10
  %s13 = scalar_select 0, %s12, %s10
  $region1: #{tpu_custom_call.1} parent=0
    #allocation2 [shape = 'u8[8192]{0}', space=vmem, size = 0x2000, scoped, tag = 'input window, operand 0, single buffered']
    #allocation3 [shape = 's32[1]{0}', space=sflag, size = 0x4, scoped, tag = 'scoped memory for tpu_custom_call.1']
    #allocation4 [shape = 's32[1]{0}', space=sflag, size = 0x4, scoped, tag = 'scoped memory for tpu_custom_call.1']
    #allocation5 [shape = 'u8[262144]{0}', space=vmem, size = 0x40000, scoped, tag = 'input window, operand 1, single buffered']
    #allocation6 [shape = 's32[1]{0}', space=sflag, size = 0x4, scoped, tag = 'scoped memory for tpu_custom_call.1']
    #allocation7 [shape = 'u8[1024]{0}', space=vmem, size = 0x400, scoped, tag = 'input window, operand 2, single buffered']
    #allocation8 [shape = 'u8[131072]{0}', space=vmem, size = 0x20000, scoped, tag = 'input window, operand 3, single buffered']
    #allocation9 [shape = 's32[1]{0}', space=sflag, size = 0x4, scoped, tag = 'scoped memory for tpu_custom_call.1']
    #allocation10 [shape = 'u8[65536]{0}', space=vmem, size = 0x10000, scoped, tag = 'input window, operand 5, single buffered']
    #allocation11 [shape = 'u8[65536]{0}', space=vmem, size = 0x10000, scoped, tag = 'input window, operand 7, single buffered']
    #allocation12 [shape = 's32[1]{0}', space=sflag, size = 0x4, scoped, tag = 'scoped memory for tpu_custom_call.1']
    #allocation13 [shape = 'u8[4096]{0}', space=vmem, size = 0x1000, scoped, tag = 'output window, operand 0, single buffered']
    %14 = vsyncpa [#allocation3], 0
    %15 = vsyncpa [#allocation6], 0
    %16 = vsyncpa [#allocation9], 0
    %17 = vsyncpa [#allocation12], 0
    %18 = vsyncpa [#allocation4], 0
    // Predicated region
    $region2: #{tpu_custom_call.1} parent=1 // pred_check
      _
    $region3: #{tpu_custom_call.1} parent=1 // pred_check_branch
      %20 = sbr.rel (0) target = $region5
    $region4: #{tpu_custom_call.1} parent=1 // pred_region
      %22 = vsyncadd [#allocation3], 0
      %s24 = sshll.u32 %s0, 4
      %s25 = int_to_ptr.hbm [resolvable:$true] %s24
      %s26 = sshll.u32 [#allocation2], 4
      %s27 = int_to_ptr.vmem [resolvable:$true] %s26
      %29 = dma.hbm_to_vmem [thread:$0]  %s25, 256, %s27, [#allocation3]
    $region5: #{tpu_custom_call.1} parent=1 // pred_fallthru
      _
    // Predicated region
    $region6: #{tpu_custom_call.1} parent=1 // pred_check
      _
    $region7: #{tpu_custom_call.1} parent=1 // pred_check_branch
      %31 = sbr.rel (0) target = $region9
    $region8: #{tpu_custom_call.1} parent=1 // pred_region
      %33 = vsyncadd [#allocation6], 0
      %s34 = sshll.u32 %s1, 4
      %s35 = int_to_ptr.hbm [resolvable:$true] %s34
      %s36 = sshll.u32 [#allocation5], 4
      %s37 = int_to_ptr.vmem [resolvable:$true] %s36
      %42 = dma.hbm_to_vmem [thread:$0]  %s35, 8192, %s37, [#allocation6], 256, 256, 16
    $region9: #{tpu_custom_call.1} parent=1 // pred_fallthru
      _
    // Predicated region
    $region10: #{tpu_custom_call.1} parent=1 // pred_check
      _
    $region11: #{tpu_custom_call.1} parent=1 // pred_check_branch
      %44 = sbr.rel (0) target = $region13
    $region12: #{tpu_custom_call.1} parent=1 // pred_region
      %46 = vsyncadd [#allocation6], 0
      %s48 = sshll.u32 %s2, 4
      %s49 = int_to_ptr.hbm [resolvable:$true] %s48
      %s50 = sshll.u32 [#allocation7], 4
      %s51 = int_to_ptr.vmem [resolvable:$true] %s50
      %53 = dma.hbm_to_vmem [thread:$0]  %s49, 32, %s51, [#allocation6]
    $region13: #{tpu_custom_call.1} parent=1 // pred_fallthru
      _
    // Predicated region
    $region14: #{tpu_custom_call.1} parent=1 // pred_check
      _
    $region15: #{tpu_custom_call.1} parent=1 // pred_check_branch
      %55 = sbr.rel (0) target = $region17
    $region16: #{tpu_custom_call.1} parent=1 // pred_region
      %57 = vsyncadd [#allocation9], 0
      %s58 = sshll.u32 %s3, 4
      %s59 = int_to_ptr.hbm [resolvable:$true] %s58
      %s60 = sshll.u32 [#allocation8], 4
      %s61 = int_to_ptr.vmem [resolvable:$true] %s60
      %66 = dma.hbm_to_vmem [thread:$0]  %s59, 4096, %s61, [#allocation9], 128, 128, 8
    $region17: #{tpu_custom_call.1} parent=1 // pred_fallthru
      _
    // Predicated region
    $region18: #{tpu_custom_call.1} parent=1 // pred_check
      _
    $region19: #{tpu_custom_call.1} parent=1 // pred_check_branch
      %68 = sbr.rel (0) target = $region21
    $region20: #{tpu_custom_call.1} parent=1 // pred_region
      _
    $region21: #{tpu_custom_call.1} parent=1 // pred_fallthru
      _
    // Predicated region
    $region22: #{tpu_custom_call.1} parent=1 // pred_check
      _
    $region23: #{tpu_custom_call.1} parent=1 // pred_check_branch
      %70 = sbr.rel (0) target = $region25
    $region24: #{tpu_custom_call.1} parent=1 // pred_region
      %72 = vsyncadd [#allocation9], 0
      %s73 = sshll.u32 %s5, 4
      %s74 = int_to_ptr.hbm [resolvable:$true] %s73
      %s75 = sshll.u32 [#allocation10], 4
      %s76 = int_to_ptr.vmem [resolvable:$true] %s75
      %81 = dma.hbm_to_vmem [thread:$0]  %s74, 2048, %s76, [#allocation9], 128, 128, 8
    $region25: #{tpu_custom_call.1} parent=1 // pred_fallthru
      _
    // Predicated region
    $region26: #{tpu_custom_call.1} parent=1 // pred_check
      _
    $region27: #{tpu_custom_call.1} parent=1 // pred_check_branch
      %83 = sbr.rel (0) target = $region29
    $region28: #{tpu_custom_call.1} parent=1 // pred_region
      _
    $region29: #{tpu_custom_call.1} parent=1 // pred_fallthru
      _
    // Predicated region
    $region30: #{tpu_custom_call.1} parent=1 // pred_check
      _
    $region31: #{tpu_custom_call.1} parent=1 // pred_check_branch
      %85 = sbr.rel (0) target = $region33
    $region32: #{tpu_custom_call.1} parent=1 // pred_region
      %87 = vsyncadd [#allocation12], 0
      %s88 = sshll.u32 %s7, 4
      %s89 = int_to_ptr.hbm [resolvable:$true] %s88
      %s90 = sshll.u32 [#allocation11], 4
      %s91 = int_to_ptr.vmem [resolvable:$true] %s90
      %96 = dma.hbm_to_vmem [thread:$0]  %s89, 2048, %s91, [#allocation12], 128, 128, 8
    $region33: #{tpu_custom_call.1} parent=1 // pred_fallthru
      _
    // Predicated region
    $region34: #{tpu_custom_call.1} parent=1 // pred_check
      _
    $region35: #{tpu_custom_call.1} parent=1 // pred_check_branch
      %98 = sbr.rel (0) target = $region37
    $region36: #{tpu_custom_call.1} parent=1 // pred_region
      _
    $region37: #{tpu_custom_call.1} parent=1 // pred_fallthru
      _
    // Predicated region
    $region38: #{tpu_custom_call.1} parent=1 // pred_check
      _
    $region39: #{tpu_custom_call.1} parent=1 // pred_check_branch
      %100 = sbr.rel (0) target = $region41
    $region40: #{tpu_custom_call.1} parent=1 // pred_region
      %102 = dma.done [#allocation3], 256
    $region41: #{tpu_custom_call.1} parent=1 // pred_fallthru
      _
    // Predicated region
    $region42: #{tpu_custom_call.1} parent=1 // pred_check
      _
    $region43: #{tpu_custom_call.1} parent=1 // pred_check_branch
      %104 = sbr.rel (0) target = $region45
    $region44: #{tpu_custom_call.1} parent=1 // pred_region
      %106 = dma.done [#allocation6], 8192
    $region45: #{tpu_custom_call.1} parent=1 // pred_fallthru
      _
    // Predicated region
    $region46: #{tpu_custom_call.1} parent=1 // pred_check
      _
    $region47: #{tpu_custom_call.1} parent=1 // pred_check_branch
      %108 = sbr.rel (0) target = $region49
    $region48: #{tpu_custom_call.1} parent=1 // pred_region
      %110 = dma.done [#allocation6], 32
    $region49: #{tpu_custom_call.1} parent=1 // pred_fallthru
      _
    // Predicated region
    $region50: #{tpu_custom_call.1} parent=1 // pred_check
      _
    $region51: #{tpu_custom_call.1} parent=1 // pred_check_branch
      %112 = sbr.rel (0) target = $region53
    $region52: #{tpu_custom_call.1} parent=1 // pred_region
      %114 = dma.done [#allocation9], 4096
    $region53: #{tpu_custom_call.1} parent=1 // pred_fallthru
      _
    // Predicated region
    $region54: #{tpu_custom_call.1} parent=1 // pred_check
      _
    $region55: #{tpu_custom_call.1} parent=1 // pred_check_branch
      %116 = sbr.rel (0) target = $region57
    $region56: #{tpu_custom_call.1} parent=1 // pred_region
      %118 = dma.done [#allocation9], 2048
    $region57: #{tpu_custom_call.1} parent=1 // pred_fallthru
      _
    // Predicated region
    $region58: #{tpu_custom_call.1} parent=1 // pred_check
      _
    $region59: #{tpu_custom_call.1} parent=1 // pred_check_branch
      %120 = sbr.rel (0) target = $region61
    $region60: #{tpu_custom_call.1} parent=1 // pred_region
      %122 = dma.done [#allocation12], 2048
    $region61: #{tpu_custom_call.1} parent=1 // pred_fallthru
      _
    %v123 = vld [vmem:[#allocation2] sm:$0xff]
    %v124 = vld [vmem:[#allocation2 + $0x8] sm:$0xff]
    %v125 = vld [vmem:[#allocation5] sm:$0xff]
    %v126 = vld [vmem:[#allocation5 + $0x8] sm:$0xff]
    %v127 = vld [vmem:[#allocation5 + $0x10] sm:$0xff]
    %v128 = vld [vmem:[#allocation5 + $0x18] sm:$0xff]
    %v129 = vld [vmem:[#allocation5 + $0x20] sm:$0xff]
    %v130 = vld [vmem:[#allocation5 + $0x28] sm:$0xff]
    %v131 = vld [vmem:[#allocation5 + $0x30] sm:$0xff]
    %v132 = vld [vmem:[#allocation5 + $0x38] sm:$0xff]
    %v133 = vld [vmem:[#allocation5 + $0x40] sm:$0xff]
    %v134 = vld [vmem:[#allocation5 + $0x48] sm:$0xff]
    %v135 = vld [vmem:[#allocation5 + $0x50] sm:$0xff]
    %v136 = vld [vmem:[#allocation5 + $0x58] sm:$0xff]
    %v137 = vld [vmem:[#allocation5 + $0x60] sm:$0xff]
    %v138 = vld [vmem:[#allocation5 + $0x68] sm:$0xff]
    %v139 = vld [vmem:[#allocation5 + $0x70] sm:$0xff]
    %v140 = vld [vmem:[#allocation5 + $0x78] sm:$0xff]
    %v141 = vld [vmem:[#allocation5 + $0x80] sm:$0xff]
    %v142 = vld [vmem:[#allocation5 + $0x88] sm:$0xff]
    %v143 = vld [vmem:[#allocation5 + $0x90] sm:$0xff]
    %v144 = vld [vmem:[#allocation5 + $0x98] sm:$0xff]
    %v145 = vld [vmem:[#allocation5 + $0xa0] sm:$0xff]
    %v146 = vld [vmem:[#allocation5 + $0xa8] sm:$0xff]
    %v147 = vld [vmem:[#allocation5 + $0xb0] sm:$0xff]
    %v148 = vld [vmem:[#allocation5 + $0xb8] sm:$0xff]
    %v149 = vld [vmem:[#allocation5 + $0xc0] sm:$0xff]
    %v150 = vld [vmem:[#allocation5 + $0xc8] sm:$0xff]
    %v151 = vld [vmem:[#allocation5 + $0xd0] sm:$0xff]
    %v152 = vld [vmem:[#allocation5 + $0xd8] sm:$0xff]
    %v153 = vld [vmem:[#allocation5 + $0xe0] sm:$0xff]
    %v154 = vld [vmem:[#allocation5 + $0xe8] sm:$0xff]
    %v155 = vld [vmem:[#allocation5 + $0xf0] sm:$0xff]
    %v156 = vld [vmem:[#allocation5 + $0xf8] sm:$0xff]
    %v157 = vld [vmem:[#allocation5 + $0x100] sm:$0xff]
    %v158 = vld [vmem:[#allocation5 + $0x108] sm:$0xff]
    %v159 = vld [vmem:[#allocation5 + $0x110] sm:$0xff]
    %v160 = vld [vmem:[#allocation5 + $0x118] sm:$0xff]
    %v161 = vld [vmem:[#allocation5 + $0x120] sm:$0xff]
    %v162 = vld [vmem:[#allocation5 + $0x128] sm:$0xff]
    %v163 = vld [vmem:[#allocation5 + $0x130] sm:$0xff]
    %v164 = vld [vmem:[#allocation5 + $0x138] sm:$0xff]
    %v165 = vld [vmem:[#allocation5 + $0x140] sm:$0xff]
    %v166 = vld [vmem:[#allocation5 + $0x148] sm:$0xff]
    %v167 = vld [vmem:[#allocation5 + $0x150] sm:$0xff]
    %v168 = vld [vmem:[#allocation5 + $0x158] sm:$0xff]
    %v169 = vld [vmem:[#allocation5 + $0x160] sm:$0xff]
    %v170 = vld [vmem:[#allocation5 + $0x168] sm:$0xff]
    %v171 = vld [vmem:[#allocation5 + $0x170] sm:$0xff]
    %v172 = vld [vmem:[#allocation5 + $0x178] sm:$0xff]
    %v173 = vld [vmem:[#allocation5 + $0x180] sm:$0xff]
    %v174 = vld [vmem:[#allocation5 + $0x188] sm:$0xff]
    %v175 = vld [vmem:[#allocation5 + $0x190] sm:$0xff]
    %v176 = vld [vmem:[#allocation5 + $0x198] sm:$0xff]
    %v177 = vld [vmem:[#allocation5 + $0x1a0] sm:$0xff]
    %v178 = vld [vmem:[#allocation5 + $0x1a8] sm:$0xff]
    %v179 = vld [vmem:[#allocation5 + $0x1b0] sm:$0xff]
    %v180 = vld [vmem:[#allocation5 + $0x1b8] sm:$0xff]
    %v181 = vld [vmem:[#allocation5 + $0x1c0] sm:$0xff]
    %v182 = vld [vmem:[#allocation5 + $0x1c8] sm:$0xff]
    %v183 = vld [vmem:[#allocation5 + $0x1d0] sm:$0xff]
    %v184 = vld [vmem:[#allocation5 + $0x1d8] sm:$0xff]
    %v185 = vld [vmem:[#allocation5 + $0x1e0] sm:$0xff]
    %v186 = vld [vmem:[#allocation5 + $0x1e8] sm:$0xff]
    %v187 = vld [vmem:[#allocation5 + $0x1f0] sm:$0xff]
    %v188 = vld [vmem:[#allocation5 + $0x1f8] sm:$0xff]
    %v189 = vld [vmem:[#allocation7] sm:$0x3]
    %v191 = vperm.slane %v189, 0
    %v192 = vperm.slane %v189, 1
    %195 = vmatpush.msra.mxu0 %v155
    %196 = vmatpush.msra.mxu0 %v153
    %197 = vmatpush.msra.mxu0 %v151
    %198 = vmatpush.msra.mxu0 %v149
    %199 = vmatpush.msra.mxu0 %v147
    %200 = vmatpush.msra.mxu0 %v145
    %201 = vmatpush.msra.mxu0 %v143
    %202 = vmatpush.msra.mxu0 %v141
    %203 = vmatpush.msra.mxu0 %v139
    %204 = vmatpush.msra.mxu0 %v137
    %205 = vmatpush.msra.mxu0 %v135
    %206 = vmatpush.msra.mxu0 %v133
    %207 = vmatpush.msra.mxu0 %v131
    %208 = vmatpush.msra.mxu0 %v129
    %209 = vmatpush.msra.mxu0 %v127
    %210 = vmatpush.msra.mxu0 %v125
    %211 = vmatmul.f32.gmra.mxu0 %v123
    %v212 = vpop.f32.mrf.mxu0
    %v213 = vadd.f32 %v191, %v212
    %214 = vdwg.mxu0
    %215 = vmatpush.msra.mxu0 %v187
    %216 = vmatpush.msra.mxu0 %v185
    %217 = vmatpush.msra.mxu0 %v183
    %218 = vmatpush.msra.mxu0 %v181
    %219 = vmatpush.msra.mxu0 %v179
    %220 = vmatpush.msra.mxu0 %v177
    %221 = vmatpush.msra.mxu0 %v175
    %222 = vmatpush.msra.mxu0 %v173
    %223 = vmatpush.msra.mxu0 %v171
    %224 = vmatpush.msra.mxu0 %v169
    %225 = vmatpush.msra.mxu0 %v167
    %226 = vmatpush.msra.mxu0 %v165
    %227 = vmatpush.msra.mxu0 %v163
    %228 = vmatpush.msra.mxu0 %v161
    %229 = vmatpush.msra.mxu0 %v159
    %230 = vmatpush.msra.mxu0 %v157
    %231 = vmatmul.f32.gmra.mxu0 %v124
    %v232 = vpop.f32.mrf.mxu0
    %v233 = vadd.f32 %v213, %v232
    %234 = vdwg.mxu0
    %235 = vmatpush.msra.mxu0 %v156
    %236 = vmatpush.msra.mxu0 %v154
    %237 = vmatpush.msra.mxu0 %v152
    %238 = vmatpush.msra.mxu0 %v150
    %239 = vmatpush.msra.mxu0 %v148
    %240 = vmatpush.msra.mxu0 %v146
    %241 = vmatpush.msra.mxu0 %v144
    %242 = vmatpush.msra.mxu0 %v142
    %243 = vmatpush.msra.mxu0 %v140
    %244 = vmatpush.msra.mxu0 %v138
    %245 = vmatpush.msra.mxu0 %v136
    %246 = vmatpush.msra.mxu0 %v134
    %247 = vmatpush.msra.mxu0 %v132
    %248 = vmatpush.msra.mxu0 %v130
    %249 = vmatpush.msra.mxu0 %v128
    %250 = vmatpush.msra.mxu0 %v126
    %251 = vmatmul.f32.gmra.mxu0 %v123
    %v252 = vpop.f32.mrf.mxu0
    %v253 = vadd.f32 %v192, %v252
    %254 = vdwg.mxu0
    %255 = vmatpush.msra.mxu0 %v188
    %256 = vmatpush.msra.mxu0 %v186
    %257 = vmatpush.msra.mxu0 %v184
    %258 = vmatpush.msra.mxu0 %v182
    %259 = vmatpush.msra.mxu0 %v180
    %260 = vmatpush.msra.mxu0 %v178
    %261 = vmatpush.msra.mxu0 %v176
    %262 = vmatpush.msra.mxu0 %v174
    %263 = vmatpush.msra.mxu0 %v172
    %264 = vmatpush.msra.mxu0 %v170
    %265 = vmatpush.msra.mxu0 %v168
    %266 = vmatpush.msra.mxu0 %v166
    %267 = vmatpush.msra.mxu0 %v164
    %268 = vmatpush.msra.mxu0 %v162
    %269 = vmatpush.msra.mxu0 %v160
    %270 = vmatpush.msra.mxu0 %v158
    %271 = vmatmul.f32.gmra.mxu0 %v124
    %v272 = vpop.f32.mrf.mxu0
    %v273 = vadd.f32 %v253, %v272
    %274 = vdwg.mxu0
    %v275 = vmax.f32 %v233, 0.0
    %v276 = vmax.f32 %v273, 0.0
    %v277 = vld [vmem:[#allocation8] sm:$0xff]
    %v278 = vld [vmem:[#allocation8 + $0x8] sm:$0xff]
    %v279 = vld [vmem:[#allocation8 + $0x10] sm:$0xff]
    %v280 = vld [vmem:[#allocation8 + $0x18] sm:$0xff]
    %v281 = vld [vmem:[#allocation8 + $0x20] sm:$0xff]
    %v282 = vld [vmem:[#allocation8 + $0x28] sm:$0xff]
    %v283 = vld [vmem:[#allocation8 + $0x30] sm:$0xff]
    %v284 = vld [vmem:[#allocation8 + $0x38] sm:$0xff]
    %v285 = vld [vmem:[#allocation8 + $0x40] sm:$0xff]
    %v286 = vld [vmem:[#allocation8 + $0x48] sm:$0xff]
    %v287 = vld [vmem:[#allocation8 + $0x50] sm:$0xff]
    %v288 = vld [vmem:[#allocation8 + $0x58] sm:$0xff]
    %v289 = vld [vmem:[#allocation8 + $0x60] sm:$0xff]
    %v290 = vld [vmem:[#allocation8 + $0x68] sm:$0xff]
    %v291 = vld [vmem:[#allocation8 + $0x70] sm:$0xff]
    %v292 = vld [vmem:[#allocation8 + $0x78] sm:$0xff]
    %v293 = vld [vmem:[#allocation8 + $0x80] sm:$0xff]
    %v294 = vld [vmem:[#allocation8 + $0x88] sm:$0xff]
    %v295 = vld [vmem:[#allocation8 + $0x90] sm:$0xff]
    %v296 = vld [vmem:[#allocation8 + $0x98] sm:$0xff]
    %v297 = vld [vmem:[#allocation8 + $0xa0] sm:$0xff]
    %v298 = vld [vmem:[#allocation8 + $0xa8] sm:$0xff]
    %v299 = vld [vmem:[#allocation8 + $0xb0] sm:$0xff]
    %v300 = vld [vmem:[#allocation8 + $0xb8] sm:$0xff]
    %v301 = vld [vmem:[#allocation8 + $0xc0] sm:$0xff]
    %v302 = vld [vmem:[#allocation8 + $0xc8] sm:$0xff]
    %v303 = vld [vmem:[#allocation8 + $0xd0] sm:$0xff]
    %v304 = vld [vmem:[#allocation8 + $0xd8] sm:$0xff]
    %v305 = vld [vmem:[#allocation8 + $0xe0] sm:$0xff]
    %v306 = vld [vmem:[#allocation8 + $0xe8] sm:$0xff]
    %v307 = vld [vmem:[#allocation8 + $0xf0] sm:$0xff]
    %v308 = vld [vmem:[#allocation8 + $0xf8] sm:$0xff]
    %v309 = vld [vmem:[%s4] sm:$0x1]
    %v311 = vperm.slane %v309, 0
    %313 = vmatpush.msra.mxu0 %v292
    %314 = vmatpush.msra.mxu0 %v291
    %315 = vmatpush.msra.mxu0 %v290
    %316 = vmatpush.msra.mxu0 %v289
    %317 = vmatpush.msra.mxu0 %v288
    %318 = vmatpush.msra.mxu0 %v287
    %319 = vmatpush.msra.mxu0 %v286
    %320 = vmatpush.msra.mxu0 %v285
    %321 = vmatpush.msra.mxu0 %v284
    %322 = vmatpush.msra.mxu0 %v283
    %323 = vmatpush.msra.mxu0 %v282
    %324 = vmatpush.msra.mxu0 %v281
    %325 = vmatpush.msra.mxu0 %v280
    %326 = vmatpush.msra.mxu0 %v279
    %327 = vmatpush.msra.mxu0 %v278
    %328 = vmatpush.msra.mxu0 %v277
    %329 = vmatmul.f32.gmra.mxu0 %v275
    %v330 = vpop.f32.mrf.mxu0
    %v331 = vadd.f32 %v311, %v330
    %332 = vdwg.mxu0
    %333 = vmatpush.msra.mxu0 %v308
    %334 = vmatpush.msra.mxu0 %v307
    %335 = vmatpush.msra.mxu0 %v306
    %336 = vmatpush.msra.mxu0 %v305
    %337 = vmatpush.msra.mxu0 %v304
    %338 = vmatpush.msra.mxu0 %v303
    %339 = vmatpush.msra.mxu0 %v302
    %340 = vmatpush.msra.mxu0 %v301
    %341 = vmatpush.msra.mxu0 %v300
    %342 = vmatpush.msra.mxu0 %v299
    %343 = vmatpush.msra.mxu0 %v298
    %344 = vmatpush.msra.mxu0 %v297
    %345 = vmatpush.msra.mxu0 %v296
    %346 = vmatpush.msra.mxu0 %v295
    %347 = vmatpush.msra.mxu0 %v294
    %348 = vmatpush.msra.mxu0 %v293
    %349 = vmatmul.f32.gmra.mxu0 %v276
    %v350 = vpop.f32.mrf.mxu0
    %v351 = vadd.f32 %v331, %v350
    %352 = vdwg.mxu0
    %v353 = vmax.f32 %v351, 0.0
    %v354 = vld [vmem:[#allocation10] sm:$0xff]
    %v355 = vld [vmem:[#allocation10 + $0x8] sm:$0xff]
    %v356 = vld [vmem:[#allocation10 + $0x10] sm:$0xff]
    %v357 = vld [vmem:[#allocation10 + $0x18] sm:$0xff]
    %v358 = vld [vmem:[#allocation10 + $0x20] sm:$0xff]
    %v359 = vld [vmem:[#allocation10 + $0x28] sm:$0xff]
    %v360 = vld [vmem:[#allocation10 + $0x30] sm:$0xff]
    %v361 = vld [vmem:[#allocation10 + $0x38] sm:$0xff]
    %v362 = vld [vmem:[#allocation10 + $0x40] sm:$0xff]
    %v363 = vld [vmem:[#allocation10 + $0x48] sm:$0xff]
    %v364 = vld [vmem:[#allocation10 + $0x50] sm:$0xff]
    %v365 = vld [vmem:[#allocation10 + $0x58] sm:$0xff]
    %v366 = vld [vmem:[#allocation10 + $0x60] sm:$0xff]
    %v367 = vld [vmem:[#allocation10 + $0x68] sm:$0xff]
    %v368 = vld [vmem:[#allocation10 + $0x70] sm:$0xff]
    %v369 = vld [vmem:[#allocation10 + $0x78] sm:$0xff]
    %v370 = vld [vmem:[%s6] sm:$0x1]
    %v372 = vperm.slane %v370, 0
    %374 = vmatpush.msra.mxu0 %v369
    %375 = vmatpush.msra.mxu0 %v368
    %376 = vmatpush.msra.mxu0 %v367
    %377 = vmatpush.msra.mxu0 %v366
    %378 = vmatpush.msra.mxu0 %v365
    %379 = vmatpush.msra.mxu0 %v364
    %380 = vmatpush.msra.mxu0 %v363
    %381 = vmatpush.msra.mxu0 %v362
    %382 = vmatpush.msra.mxu0 %v361
    %383 = vmatpush.msra.mxu0 %v360
    %384 = vmatpush.msra.mxu0 %v359
    %385 = vmatpush.msra.mxu0 %v358
    %386 = vmatpush.msra.mxu0 %v357
    %387 = vmatpush.msra.mxu0 %v356
    %388 = vmatpush.msra.mxu0 %v355
    %389 = vmatpush.msra.mxu0 %v354
    %390 = vmatmul.f32.gmra.mxu0 %v353
    %v391 = vpop.f32.mrf.mxu0
    %v392 = vadd.f32 %v372, %v391
    %393 = vdwg.mxu0
    %v394 = vmax.f32 %v392, 0.0
    %v395 = vld [vmem:[#allocation11] sm:$0xff]
    %v396 = vld [vmem:[#allocation11 + $0x8] sm:$0xff]
    %v397 = vld [vmem:[#allocation11 + $0x10] sm:$0xff]
    %v398 = vld [vmem:[#allocation11 + $0x18] sm:$0xff]
    %v399 = vld [vmem:[#allocation11 + $0x20] sm:$0xff]
    %v400 = vld [vmem:[#allocation11 + $0x28] sm:$0xff]
    %v401 = vld [vmem:[#allocation11 + $0x30] sm:$0xff]
    %v402 = vld [vmem:[#allocation11 + $0x38] sm:$0xff]
    %v403 = vld [vmem:[#allocation11 + $0x40] sm:$0xff]
    %v404 = vld [vmem:[#allocation11 + $0x48] sm:$0xff]
    %v405 = vld [vmem:[#allocation11 + $0x50] sm:$0xff]
    %v406 = vld [vmem:[#allocation11 + $0x58] sm:$0xff]
    %v407 = vld [vmem:[#allocation11 + $0x60] sm:$0xff]
    %v408 = vld [vmem:[#allocation11 + $0x68] sm:$0xff]
    %v409 = vld [vmem:[#allocation11 + $0x70] sm:$0xff]
    %v410 = vld [vmem:[#allocation11 + $0x78] sm:$0xff]
    %v411 = vld [vmem:[%s8] sm:$0x1]
    %v413 = vperm.slane %v411, 0
    %415 = vmatpush.msra.mxu0 %v410
    %416 = vmatpush.msra.mxu0 %v409
    %417 = vmatpush.msra.mxu0 %v408
    %418 = vmatpush.msra.mxu0 %v407
    %419 = vmatpush.msra.mxu0 %v406
    %420 = vmatpush.msra.mxu0 %v405
    %421 = vmatpush.msra.mxu0 %v404
    %422 = vmatpush.msra.mxu0 %v403
    %423 = vmatpush.msra.mxu0 %v402
    %424 = vmatpush.msra.mxu0 %v401
    %425 = vmatpush.msra.mxu0 %v400
    %426 = vmatpush.msra.mxu0 %v399
    %427 = vmatpush.msra.mxu0 %v398
    %428 = vmatpush.msra.mxu0 %v397
    %429 = vmatpush.msra.mxu0 %v396
    %430 = vmatpush.msra.mxu0 %v395
    %431 = vmatmul.f32.gmra.mxu0 %v394
    %v432 = vpop.f32.mrf.mxu0
    %v433 = vadd.f32 %v413, %v432
    %434 = vdwg.mxu0
    %435 = vst [vmem:[#allocation13] sm:$0xff] %v433
    // Predicated region
    $region62: #{tpu_custom_call.1} parent=1 // pred_check
      _
    $region63: #{tpu_custom_call.1} parent=1 // pred_check_branch
      %437 = sbr.rel (0) target = $region65
    $region64: #{tpu_custom_call.1} parent=1 // pred_region
      %439 = vsyncadd [#allocation4], 0
      %s441 = sshll.u32 [#allocation13], 4
      %s442 = int_to_ptr.vmem [resolvable:$true] %s441
      %s443 = sshll.u32 %s9, 4
      %s444 = int_to_ptr.hbm [resolvable:$true] %s443
      %446 = dma.vmem_to_hbm [thread:$0]  %s442, 128, %s444, [#allocation4]
    $region65: #{tpu_custom_call.1} parent=1 // pred_fallthru
      _
    // Predicated region
    $region66: #{tpu_custom_call.1} parent=1 // pred_check
      _
    $region67: #{tpu_custom_call.1} parent=1 // pred_check_branch
      %448 = sbr.rel (0) target = $region69
    $region68: #{tpu_custom_call.1} parent=1 // pred_region
      %450 = dma.done [#allocation4], 128
    $region69: #{tpu_custom_call.1} parent=1 // pred_fallthru
      _
    %451 = vsyncpa [#allocation3], 1
    %452 = vsyncpa [#allocation6], 1
    %453 = vsyncpa [#allocation9], 1
    %454 = vsyncpa [#allocation12], 1
    %455 = vsyncpa [#allocation4], 1

</llo_original>
